<compile_context>
chip_gen: v7x
topology: tpu7x:2x2x1
jax: 0.10.0
libtpu: 0.0.40
codegen_flags: <defaults>
</compile_context>

<pallas_src>
import jax
import jax.numpy as jnp
from jax.experimental import pallas as pl
from jax.experimental.pallas import tpu as pltpu


def _round_up(x, m):
    return ((x + m - 1) // m) * m


def _char_cnn_maxpool_kernel(x_ref, w_ref, b_ref, o_ref):
    # x_ref: (tile_n, word_len*char_dim)        compute dtype (bf16 by default)
    # w_ref: (word_len*char_dim, conv_len*OC)   compute dtype
    # b_ref: (1, OC)                            f32
    # o_ref: (tile_n, OC)                       f32
    oc = o_ref.shape[-1]
    conv_len = w_ref.shape[-1] // oc

    # One fat MXU matmul per tile: M = tile_n, K = word_len*char_dim, N = conv_len*OC.
    score = jnp.dot(x_ref[...], w_ref[...], preferred_element_type=jnp.float32)

    # Max-pool over conv positions = max over the conv_len lane groups (static slices).
    res = score[:, 0:oc]
    for t in range(1, conv_len):
        res = jnp.maximum(res, score[:, t * oc:(t + 1) * oc])

    # Bias is position-invariant, so it commutes with the max.
    o_ref[...] = (res + b_ref[...]).astype(o_ref.dtype)


def char_cnn_maxpool(char_ids, embed_table, conv_w, conv_b, *,
                     tile_n=512, compute_dtype=jnp.bfloat16):
    batch, seq_len, word_len = char_ids.shape
    char_num, char_dim = embed_table.shape
    out_channels, in_ch, window_size, kw = conv_w.shape
    assert in_ch == 1 and kw == char_dim
    assert word_len >= window_size, "Conv2d 'valid' window larger than word_len"
    conv_len = word_len - window_size + 1

    n = batch * seq_len
    k_dim = word_len * char_dim

    # ---- glue (XLA): embedding gather + flatten + cast --------------------------
    # TODO(synk): fuse the embedding gather into the kernel (one-hot matmul or DMA gather)
    # to avoid materializing the (N, word_len*char_dim) intermediate in HBM.
    x2d = jnp.take(embed_table, char_ids.reshape(-1), axis=0)
    x2d = x2d.reshape(n, k_dim).astype(compute_dtype)

    # ---- weight re-layout: Conv2d weight -> block matrix (WL*D, conv_len*OC) ----
    # W_big[(t+w)*D + d, t*OC + c] = conv_w[c, 0, w, d]; zeros elsewhere.
    w_pos = jnp.transpose(conv_w[:, 0], (1, 2, 0)).reshape(window_size * char_dim,
                                                           out_channels)
    w_big = jnp.zeros((k_dim, conv_len * out_channels), jnp.float32)
    for t in range(conv_len):
        w_big = w_big.at[t * char_dim:t * char_dim + window_size * char_dim,
                         t * out_channels:(t + 1) * out_channels].set(w_pos)
    w_big = w_big.astype(compute_dtype)
    bias = conv_b.reshape(1, out_channels).astype(jnp.float32)

    # ---- tile & pad the word axis (no divisibility requirement) -----------------
    tile_n = _round_up(max(8, tile_n), 128)       # keep blocks (8/16,128)-friendly
    tile_n = min(tile_n, _round_up(n, 128))       # don't over-tile tiny problems
    n_pad = _round_up(n, tile_n)
    if n_pad != n:
        x2d = jnp.pad(x2d, ((0, n_pad - n), (0, 0)))

    out = pl.pallas_call(
        _char_cnn_maxpool_kernel,
        out_shape=jax.ShapeDtypeStruct((n_pad, out_channels), jnp.float32),
        grid_spec=pltpu.PrefetchScalarGridSpec(
            num_scalar_prefetch=0,
            grid=(n_pad // tile_n,),
            in_specs=[
                pl.BlockSpec((tile_n, k_dim), lambda i: (i, 0)),
                pl.BlockSpec((k_dim, conv_len * out_channels), lambda i: (0, 0)),
                pl.BlockSpec((1, out_channels), lambda i: (0, 0)),
            ],
            out_specs=pl.BlockSpec((tile_n, out_channels), lambda i: (i, 0)),
        ),
        compiler_params=pltpu.CompilerParams(
            dimension_semantics=("parallel",)),
    )(x2d, w_big, bias)

    return out[:n].reshape(batch, seq_len, out_channels)


def _reference(char_ids, embed_table, conv_w, conv_b):
    # Pure-JAX f32 reference reproducing the PyTorch forward exactly.
    x = embed_table[char_ids]                               # (B, S, WL, D)
    b_, s_, wl, d = x.shape
    oc, _, ws, _ = conv_w.shape
    xr = x.reshape(-1, wl, d)
    l = wl - ws + 1
    wf = conv_w[:, 0].reshape(oc, ws * d)                   # (OC, WS*D)
    cols = []
    for t in range(l):
        patch = xr[:, t:t + ws, :].reshape(xr.shape[0], ws * d)
        cols.append(patch @ wf.T + conv_b)
    conv = jnp.stack(cols, axis=-1)                         # (N, OC, L)
    return conv.max(axis=-1).reshape(b_, s_, oc)


if __name__ == "__main__":
    # Shapes from the original module's driver code.
    char_num, char_dim = 26, 10
    batch, seq_len, word_len = 10, 20, 12
    out_channels, window_size = 8, 3

    key = jax.random.PRNGKey(0)
    k_ids, k_emb, k_w, k_b = jax.random.split(key, 4)
    # torch .random_(0, char_num - 1) draws in [0, char_num - 2]
    char_ids = jax.random.randint(k_ids, (batch, seq_len, word_len), 0,
                                  char_num - 1, dtype=jnp.int32)
    # nn.Embedding default init: N(0, 1)
    embed_table = jax.random.normal(k_emb, (char_num, char_dim), jnp.float32)
    # nn.Conv2d default init: U(-1/sqrt(fan_in), 1/sqrt(fan_in))
    fan_in = 1 * window_size * char_dim
    bound = 1.0 / (fan_in ** 0.5)
    conv_w = jax.random.uniform(k_w, (out_channels, 1, window_size, char_dim),
                                jnp.float32, -bound, bound)
    conv_b = jax.random.uniform(k_b, (out_channels,), jnp.float32, -bound, bound)

    res = char_cnn_maxpool(char_ids, embed_table, conv_w, conv_b)
    res = jax.block_until_ready(res)
    assert res.shape == (batch, seq_len, out_channels)

    # Tight check: reference on the same bf16-quantized inputs the kernel feeds the MXU.
    emb_q = embed_table.astype(jnp.bfloat16).astype(jnp.float32)
    w_q = conv_w.astype(jnp.bfloat16).astype(jnp.float32)
    ref_q = _reference(char_ids, emb_q, w_q, conv_b)
    assert jnp.allclose(res, ref_q, atol=1e-4, rtol=1e-4), "mismatch vs bf16-quantized reference"

    # Loose check: full-f32 PyTorch-equivalent forward (only bf16 input quantization differs).
    ref_f32 = _reference(char_ids, embed_table, conv_w, conv_b)
    assert jnp.allclose(res, ref_f32, atol=5e-2, rtol=5e-2), "mismatch vs f32 reference"

    print("KERNEL_OK")
</pallas_src>

<mosaic_0001>
module attributes {stable_mosaic.version = 11 : i64} {
  func.func @_char_cnn_maxpool_kernel(%arg0: i32, %arg1: memref<256x120xbf16, #tpu.memory_space<vmem>>, %arg2: memref<120x80xbf16, #tpu.memory_space<vmem>>, %arg3: memref<1x8xf32, #tpu.memory_space<vmem>>, %arg4: memref<256x8xf32, #tpu.memory_space<vmem>>) attributes {dimension_semantics = [#tpu.dimension_semantics<parallel>], iteration_bounds = array<i64: 1>, scalar_prefetch = 0 : i64, scratch_operands = 0 : i64, tpu.core_type = #tpu.core_type<tc>, window_params = [{transform_indices = @transform_0, window_bounds = array<i64: 256, 120>}, {pipeline_mode = #tpu.pipeline_mode<synchronous>, transform_indices = @transform_1, window_bounds = array<i64: 120, 80>}, {pipeline_mode = #tpu.pipeline_mode<synchronous>, transform_indices = @transform_2, window_bounds = array<i64: 1, 8>}, {transform_indices = @transform_3, window_bounds = array<i64: 256, 8>}]} {
    %c0 = arith.constant 0 : index
    %c0_0 = arith.constant 0 : index
    %0 = vector.load %arg1[%c0, %c0_0] : memref<256x120xbf16, #tpu.memory_space<vmem>>, vector<256x120xbf16>
    %c0_1 = arith.constant 0 : index
    %c0_2 = arith.constant 0 : index
    %1 = vector.load %arg2[%c0_1, %c0_2] : memref<120x80xbf16, #tpu.memory_space<vmem>>, vector<120x80xbf16>
    %cst = arith.constant dense<0.000000e+00> : vector<256x80xf32>
    %2 = tpu.matmul %0, %1, %cst {dimension_numbers = #tpu.dot_dimension_numbers<[1], [0], [0], [1], [0, 0, 1, 1], [], []>} : vector<256x120xbf16>, vector<120x80xbf16>, vector<256x80xf32> -> vector<256x80xf32>
    %3 = vector.extract_strided_slice %2 {offsets = [0, 0], sizes = [256, 8], strides = [1, 1]} : vector<256x80xf32> to vector<256x8xf32>
    %4 = vector.extract_strided_slice %2 {offsets = [0, 8], sizes = [256, 8], strides = [1, 1]} : vector<256x80xf32> to vector<256x8xf32>
    %5 = arith.maximumf %3, %4 : vector<256x8xf32>
    %6 = vector.extract_strided_slice %2 {offsets = [0, 16], sizes = [256, 8], strides = [1, 1]} : vector<256x80xf32> to vector<256x8xf32>
    %7 = arith.maximumf %5, %6 : vector<256x8xf32>
    %8 = vector.extract_strided_slice %2 {offsets = [0, 24], sizes = [256, 8], strides = [1, 1]} : vector<256x80xf32> to vector<256x8xf32>
    %9 = arith.maximumf %7, %8 : vector<256x8xf32>
    %10 = vector.extract_strided_slice %2 {offsets = [0, 32], sizes = [256, 8], strides = [1, 1]} : vector<256x80xf32> to vector<256x8xf32>
    %11 = arith.maximumf %9, %10 : vector<256x8xf32>
    %12 = vector.extract_strided_slice %2 {offsets = [0, 40], sizes = [256, 8], strides = [1, 1]} : vector<256x80xf32> to vector<256x8xf32>
    %13 = arith.maximumf %11, %12 : vector<256x8xf32>
    %14 = vector.extract_strided_slice %2 {offsets = [0, 48], sizes = [256, 8], strides = [1, 1]} : vector<256x80xf32> to vector<256x8xf32>
    %15 = arith.maximumf %13, %14 : vector<256x8xf32>
    %16 = vector.extract_strided_slice %2 {offsets = [0, 56], sizes = [256, 8], strides = [1, 1]} : vector<256x80xf32> to vector<256x8xf32>
    %17 = arith.maximumf %15, %16 : vector<256x8xf32>
    %18 = vector.extract_strided_slice %2 {offsets = [0, 64], sizes = [256, 8], strides = [1, 1]} : vector<256x80xf32> to vector<256x8xf32>
    %19 = arith.maximumf %17, %18 : vector<256x8xf32>
    %20 = vector.extract_strided_slice %2 {offsets = [0, 72], sizes = [256, 8], strides = [1, 1]} : vector<256x80xf32> to vector<256x8xf32>
    %21 = arith.maximumf %19, %20 : vector<256x8xf32>
    %c0_3 = arith.constant 0 : index
    %c0_4 = arith.constant 0 : index
    %22 = vector.load %arg3[%c0_3, %c0_4] : memref<1x8xf32, #tpu.memory_space<vmem>>, vector<1x8xf32>
    %23 = vector.broadcast %22 : vector<1x8xf32> to vector<256x8xf32>
    %24 = arith.addf %21, %23 : vector<256x8xf32>
    %c0_5 = arith.constant 0 : index
    %c0_6 = arith.constant 0 : index
    %25 = vector.load %arg4[%c0_5, %c0_6] : memref<256x8xf32, #tpu.memory_space<vmem>>, vector<256x8xf32>
    tpu.vector_store %arg4[%c0_5, %c0_6], %24 {strides = array<i32>} : memref<256x8xf32, #tpu.memory_space<vmem>>, vector<256x8xf32>,
    return
  }
  func.func @transform_0(%arg0: i32) -> (i32, i32) {
    %c0_i32 = arith.constant 0 : i32
    %c0_i32_0 = arith.constant 0 : i32
    return %arg0, %c0_i32 : i32, i32
  }
  func.func @transform_1(%arg0: i32) -> (i32, i32) {
    %c0_i32 = arith.constant 0 : i32
    %c0_i32_0 = arith.constant 0 : i32
    %c0_i32_1 = arith.constant 0 : i32
    return %c0_i32, %c0_i32_0 : i32, i32
  }
  func.func @transform_2(%arg0: i32) -> (i32, i32) {
    %c0_i32 = arith.constant 0 : i32
    %c0_i32_0 = arith.constant 0 : i32
    %c0_i32_1 = arith.constant 0 : i32
    return %c0_i32, %c0_i32_0 : i32, i32
  }
  func.func @transform_3(%arg0: i32) -> (i32, i32) {
    %c0_i32 = arith.constant 0 : i32
    %c0_i32_0 = arith.constant 0 : i32
    return %arg0, %c0_i32 : i32, i32
  }
}

</mosaic_0001>

<llo_original>
// kernel: tpu_custom_call.1
$region0: #{tpu_custom_call.1}
  #allocation0 [shape = 'u32[]', space=smem, size = 0x4, offset = 0x4, fixed_abs, tag = 'smem constant byte address 0x4 - core index']
  #allocation1 [shape = 'u32[144,128]{1,0:T(1,128)}', space=vmem, size = 0x12000, scoped, tag = 'internal scratch']
  %s0 = inlined_call_operand.vmem [shape: bf16[256,120], index: 0, kind: input, shape index: {}]
  %s1 = inlined_call_operand.vmem [shape: bf16[120,80], index: 1, kind: input, shape index: {}]
  %s2 = inlined_call_operand.vmem [shape: f32[1,8], index: 2, kind: input, shape index: {}]
  %s3 = inlined_call_operand.vmem [shape: f32[256,8], index: 3, kind: output, shape index: {}]
  %s4 = sld [smem:[#allocation0]]
  $region22: #{tpu_custom_call.1} parent=0
    _
  %s6 = ssub.s32 1, %s4
  %s7 = scalar_select 0, %s6, %s4
  // Predicated region
  $region2: #{tpu_custom_call.1} parent=0 // pred_check
    _
  $region3: #{tpu_custom_call.1} parent=0 // pred_check_branch
    %9 = sbr.rel (0) target = $region5
  $region4: #{tpu_custom_call.1} parent=0 // pred_region
    _
  $region5: #{tpu_custom_call.1} parent=0 // pred_fallthru
    _
  // Predicated region
  $region6: #{tpu_custom_call.1} parent=0 // pred_check
    _
  $region7: #{tpu_custom_call.1} parent=0 // pred_check_branch
    %11 = sbr.rel (0) target = $region9
  $region8: #{tpu_custom_call.1} parent=0 // pred_region
    _
  $region9: #{tpu_custom_call.1} parent=0 // pred_fallthru
    _
  // Predicated region
  $region10: #{tpu_custom_call.1} parent=0 // pred_check
    _
  $region11: #{tpu_custom_call.1} parent=0 // pred_check_branch
    %13 = sbr.rel (0) target = $region13
  $region12: #{tpu_custom_call.1} parent=0 // pred_region
    _
  $region13: #{tpu_custom_call.1} parent=0 // pred_fallthru
    _
  %v15 = vld [vmem:[%s0] sm:$0xf]
  %v16 = vld [vmem:[%s0 + $0x4] sm:$0xf]
  %v17 = vld [vmem:[%s0 + $0x8] sm:$0xf]
  %v18 = vld [vmem:[%s0 + $0xc] sm:$0xf]
  %v19 = vld [vmem:[%s0 + $0x10] sm:$0xf]
  %v20 = vld [vmem:[%s0 + $0x14] sm:$0xf]
  %v21 = vld [vmem:[%s0 + $0x18] sm:$0xf]
  %v22 = vld [vmem:[%s0 + $0x1c] sm:$0xf]
  %v23 = vld [vmem:[%s0 + $0x20] sm:$0xf]
  %v24 = vld [vmem:[%s0 + $0x24] sm:$0xf]
  %v25 = vld [vmem:[%s0 + $0x28] sm:$0xf]
  %v26 = vld [vmem:[%s0 + $0x2c] sm:$0xf]
  %v27 = vld [vmem:[%s0 + $0x30] sm:$0xf]
  %v28 = vld [vmem:[%s0 + $0x34] sm:$0xf]
  %v29 = vld [vmem:[%s0 + $0x38] sm:$0xf]
  %v30 = vld [vmem:[%s0 + $0x3c] sm:$0xf]
  %v31 = vld [vmem:[%s0 + $0x40] sm:$0xf]
  %v32 = vld [vmem:[%s0 + $0x44] sm:$0xf]
  %v33 = vld [vmem:[%s0 + $0x48] sm:$0xf]
  %v34 = vld [vmem:[%s0 + $0x4c] sm:$0xf]
  %v35 = vld [vmem:[%s0 + $0x50] sm:$0xf]
  %v36 = vld [vmem:[%s0 + $0x54] sm:$0xf]
  %v37 = vld [vmem:[%s0 + $0x58] sm:$0xf]
  %v38 = vld [vmem:[%s0 + $0x5c] sm:$0xf]
  %v39 = vld [vmem:[%s0 + $0x60] sm:$0xf]
  %v40 = vld [vmem:[%s0 + $0x64] sm:$0xf]
  %v41 = vld [vmem:[%s0 + $0x68] sm:$0xf]
  %v42 = vld [vmem:[%s0 + $0x6c] sm:$0xf]
  %v43 = vld [vmem:[%s0 + $0x70] sm:$0xf]
  %v44 = vld [vmem:[%s0 + $0x74] sm:$0xf]
  %v45 = vld [vmem:[%s0 + $0x78] sm:$0xf]
  %v46 = vld [vmem:[%s0 + $0x7c] sm:$0xf]
  %v47 = vld [vmem:[%s1] sm:$0xf]
  %v48 = vld [vmem:[%s1 + $0x4] sm:$0xf]
  %v49 = vld [vmem:[%s1 + $0x8] sm:$0xf]
  %v50 = vld [vmem:[%s1 + $0xc] sm:$0xf]
  %v51 = vld [vmem:[%s1 + $0x10] sm:$0xf]
  %v52 = vld [vmem:[%s1 + $0x14] sm:$0xf]
  %v53 = vld [vmem:[%s1 + $0x18] sm:$0xf]
  %v54 = vld [vmem:[%s1 + $0x1c] sm:$0xf]
  %v55 = vld [vmem:[%s1 + $0x20] sm:$0xf]
  %v56 = vld [vmem:[%s1 + $0x24] sm:$0xf]
  %v57 = vld [vmem:[%s1 + $0x28] sm:$0xf]
  %v58 = vld [vmem:[%s1 + $0x2c] sm:$0xf]
  %v59 = vld [vmem:[%s1 + $0x30] sm:$0xf]
  %v60 = vld [vmem:[%s1 + $0x34] sm:$0xf]
  %v61 = vld [vmem:[%s1 + $0x38] sm:$0xf]
  %v94 = vunpack.c.l.b16 %v15
  %v95 = vunpack.c.l.b16 %v16
  %v96 = vunpack.c.l.b16 %v17
  %v97 = vunpack.c.l.b16 %v18
  %v98 = vunpack.c.l.b16 %v19
  %v99 = vunpack.c.l.b16 %v20
  %v100 = vunpack.c.l.b16 %v21
  %v101 = vunpack.c.l.b16 %v22
  %v102 = vunpack.c.l.b16 %v23
  %v103 = vunpack.c.l.b16 %v24
  %v104 = vunpack.c.l.b16 %v25
  %v105 = vunpack.c.l.b16 %v26
  %v106 = vunpack.c.l.b16 %v27
  %v107 = vunpack.c.l.b16 %v28
  %v108 = vunpack.c.l.b16 %v29
  %v109 = vunpack.c.l.b16 %v30
  %v110 = vunpack.c.l.b16 %v31
  %v111 = vunpack.c.l.b16 %v32
  %v112 = vunpack.c.l.b16 %v33
  %v113 = vunpack.c.l.b16 %v34
  %v114 = vunpack.c.l.b16 %v35
  %v115 = vunpack.c.l.b16 %v36
  %v116 = vunpack.c.l.b16 %v37
  %v117 = vunpack.c.l.b16 %v38
  %v118 = vunpack.c.l.b16 %v39
  %v119 = vunpack.c.l.b16 %v40
  %v120 = vunpack.c.l.b16 %v41
  %v121 = vunpack.c.l.b16 %v42
  %v122 = vunpack.c.l.b16 %v43
  %v123 = vunpack.c.l.b16 %v44
  %v124 = vunpack.c.l.b16 %v45
  %v125 = vunpack.c.l.b16 %v46
  %v126 = vpack.c.b16 %v95, %v94
  %v127 = vpack.c.b16 %v97, %v96
  %v128 = vpack.c.b16 %v99, %v98
  %v129 = vpack.c.b16 %v101, %v100
  %v130 = vpack.c.b16 %v103, %v102
  %v131 = vpack.c.b16 %v105, %v104
  %v132 = vpack.c.b16 %v107, %v106
  %v133 = vpack.c.b16 %v109, %v108
  %v134 = vpack.c.b16 %v111, %v110
  %v135 = vpack.c.b16 %v113, %v112
  %v136 = vpack.c.b16 %v115, %v114
  %v137 = vpack.c.b16 %v117, %v116
  %v138 = vpack.c.b16 %v119, %v118
  %v139 = vpack.c.b16 %v121, %v120
  %v140 = vpack.c.b16 %v123, %v122
  %v141 = vpack.c.b16 %v125, %v124
  %v157 = vunpack.c.l.b16 %v47
  %v158 = vunpack.c.l.b16 %v48
  %v159 = vunpack.c.l.b16 %v49
  %v160 = vunpack.c.l.b16 %v50
  %v161 = vunpack.c.l.b16 %v51
  %v162 = vunpack.c.l.b16 %v52
  %v163 = vunpack.c.l.b16 %v53
  %v164 = vunpack.c.l.b16 %v54
  %v165 = vunpack.c.l.b16 %v55
  %v166 = vunpack.c.l.b16 %v56
  %v167 = vunpack.c.l.b16 %v57
  %v168 = vunpack.c.l.b16 %v58
  %v169 = vunpack.c.l.b16 %v59
  %v170 = vunpack.c.l.b16 %v60
  %v171 = vunpack.c.l.b16 %v61
  %v172 = vpack.c.b16 %v158, %v157
  %v173 = vpack.c.b16 %v160, %v159
  %v174 = vpack.c.b16 %v162, %v161
  %v175 = vpack.c.b16 %v164, %v163
  %v176 = vpack.c.b16 %v166, %v165
  %v177 = vpack.c.b16 %v168, %v167
  %v178 = vpack.c.b16 %v170, %v169
  %v179 = vpack.c.b16 %v171, %v171
  %vm187 = vcmask 982016
  %v189 = vsel %vm187, %v126, 0
  %v192 = vsel %vm187, %v127, 0
  %v195 = vsel %vm187, %v128, 0
  %v198 = vsel %vm187, %v129, 0
  %v201 = vsel %vm187, %v130, 0
  %v204 = vsel %vm187, %v131, 0
  %v207 = vsel %vm187, %v132, 0
  %v210 = vsel %vm187, %v133, 0
  %v213 = vsel %vm187, %v134, 0
  %v216 = vsel %vm187, %v135, 0
  %v219 = vsel %vm187, %v136, 0
  %v222 = vsel %vm187, %v137, 0
  %v225 = vsel %vm187, %v138, 0
  %v228 = vsel %vm187, %v139, 0
  %v231 = vsel %vm187, %v140, 0
  %v234 = vsel %vm187, %v141, 0
  %vm236 = vcmask 1043456
  %v238 = vsel %vm236, %v179, 0
  %240 = vmatprep.subr.bf16.mxu0 0
  %241 = vmatpush1.bf16.msra.mxu0 %v172
  %242 = vmatprep.subr.bf16.mxu0 0
  %243 = vmatpush1.bf16.msra.mxu0 %v173
  %244 = vmatprep.subr.bf16.mxu0 0
  %245 = vmatpush1.bf16.msra.mxu0 %v174
  %246 = vmatprep.subr.bf16.mxu0 0
  %247 = vmatpush1.bf16.msra.mxu0 %v175
  %248 = vmatprep.subr.bf16.mxu0 0
  %249 = vmatpush1.bf16.msra.mxu0 %v176
  %250 = vmatprep.subr.bf16.mxu0 0
  %251 = vmatpush1.bf16.msra.mxu0 %v177
  %252 = vmatprep.subr.bf16.mxu0 0
  %253 = vmatpush1.bf16.msra.mxu0 %v178
  %254 = vmatprep.subr.bf16.mxu0 0
  %255 = vmatpush1.bf16.msra.mxu0 %v238
  %256 = vmatprep.subr.bf16.mxu0 0
  %257 = vmatpush1.bf16.msra.mxu0 0
  %258 = vmatprep.subr.bf16.mxu0 0
  %259 = vmatpush1.bf16.msra.mxu0 0
  %260 = vmatprep.subr.bf16.mxu0 0
  %261 = vmatpush1.bf16.msra.mxu0 0
  %262 = vmatprep.subr.bf16.mxu0 0
  %263 = vmatpush1.bf16.msra.mxu0 0
  %264 = vmatprep.subr.bf16.mxu0 0
  %265 = vmatpush1.bf16.msra.mxu0 0
  %266 = vmatprep.subr.bf16.mxu0 0
  %267 = vmatpush1.bf16.msra.mxu0 0
  %268 = vmatprep.subr.bf16.mxu0 0
  %269 = vmatpush1.bf16.msra.mxu0 0
  %270 = vmatprep.subr.bf16.mxu0 0
  %271 = vmatpush1.bf16.msra.mxu0 0
  %272 = vmatprep.mubr.bf16.mxu0 0
  %273 = vmatmul.mubr.bf16.gmra.mrb[0].mxu0 %v189
  %v274 = vpop.f32.mrb[0].mxu0
  %v275 = vadd.f32 0.0, %v274
  %v276 = vpop.f32.mrb[0].mxu0
  %v277 = vpop.f32.mrb[0].mxu0
  %v278 = vadd.f32 0.0, %v277
  %v279 = vpop.f32.mrb[0].mxu0
  %280 = vmatprep.mubr.bf16.mxu0 0
  %281 = vmatmul.mubr.bf16.gmra.mrb[0].mxu0 %v192
  %v282 = vpop.f32.mrb[0].mxu0
  %v283 = vadd.f32 0.0, %v282
  %v284 = vpop.f32.mrb[0].mxu0
  %v285 = vpop.f32.mrb[0].mxu0
  %v286 = vadd.f32 0.0, %v285
  %v287 = vpop.f32.mrb[0].mxu0
  %288 = vmatprep.mubr.bf16.mxu0 0
  %289 = vmatmul.mubr.bf16.gmra.mrb[0].mxu0 %v195
  %v290 = vpop.f32.mrb[0].mxu0
  %v291 = vadd.f32 0.0, %v290
  %v292 = vpop.f32.mrb[0].mxu0
  %v293 = vpop.f32.mrb[0].mxu0
  %v294 = vadd.f32 0.0, %v293
  %v295 = vpop.f32.mrb[0].mxu0
  %296 = vmatprep.mubr.bf16.mxu0 0
  %297 = vmatmul.mubr.bf16.gmra.mrb[0].mxu0 %v198
  %v298 = vpop.f32.mrb[0].mxu0
  %v299 = vadd.f32 0.0, %v298
  %v300 = vpop.f32.mrb[0].mxu0
  %v301 = vpop.f32.mrb[0].mxu0
  %v302 = vadd.f32 0.0, %v301
  %v303 = vpop.f32.mrb[0].mxu0
  %304 = vmatprep.mubr.bf16.mxu0 0
  %305 = vmatmul.mubr.bf16.gmra.mrb[0].mxu0 %v201
  %v306 = vpop.f32.mrb[0].mxu0
  %v307 = vadd.f32 0.0, %v306
  %v308 = vpop.f32.mrb[0].mxu0
  %v309 = vpop.f32.mrb[0].mxu0
  %v310 = vadd.f32 0.0, %v309
  %v311 = vpop.f32.mrb[0].mxu0
  %312 = vmatprep.mubr.bf16.mxu0 0
  %313 = vmatmul.mubr.bf16.gmra.mrb[0].mxu0 %v204
  %v314 = vpop.f32.mrb[0].mxu0
  %v315 = vadd.f32 0.0, %v314
  %v316 = vpop.f32.mrb[0].mxu0
  %v317 = vpop.f32.mrb[0].mxu0
  %v318 = vadd.f32 0.0, %v317
  %v319 = vpop.f32.mrb[0].mxu0
  %320 = vmatprep.mubr.bf16.mxu0 0
  %321 = vmatmul.mubr.bf16.gmra.mrb[0].mxu0 %v207
  %v322 = vpop.f32.mrb[0].mxu0
  %v323 = vadd.f32 0.0, %v322
  %v324 = vpop.f32.mrb[0].mxu0
  %v325 = vpop.f32.mrb[0].mxu0
  %v326 = vadd.f32 0.0, %v325
  %v327 = vpop.f32.mrb[0].mxu0
  %328 = vmatprep.mubr.bf16.mxu0 0
  %329 = vmatmul.mubr.bf16.gmra.mrb[0].mxu0 %v210
  %v330 = vpop.f32.mrb[0].mxu0
  %v331 = vadd.f32 0.0, %v330
  %v332 = vpop.f32.mrb[0].mxu0
  %v333 = vpop.f32.mrb[0].mxu0
  %v334 = vadd.f32 0.0, %v333
  %v335 = vpop.f32.mrb[0].mxu0
  %336 = vmatprep.mubr.bf16.mxu0 0
  %337 = vmatmul.mubr.bf16.gmra.mrb[0].mxu0 %v213
  %v338 = vpop.f32.mrb[0].mxu0
  %v339 = vadd.f32 0.0, %v338
  %v340 = vpop.f32.mrb[0].mxu0
  %v341 = vpop.f32.mrb[0].mxu0
  %v342 = vadd.f32 0.0, %v341
  %v343 = vpop.f32.mrb[0].mxu0
  %344 = vmatprep.mubr.bf16.mxu0 0
  %345 = vmatmul.mubr.bf16.gmra.mrb[0].mxu0 %v216
  %v346 = vpop.f32.mrb[0].mxu0
  %v347 = vadd.f32 0.0, %v346
  %v348 = vpop.f32.mrb[0].mxu0
  %v349 = vpop.f32.mrb[0].mxu0
  %v350 = vadd.f32 0.0, %v349
  %v351 = vpop.f32.mrb[0].mxu0
  %352 = vmatprep.mubr.bf16.mxu0 0
  %353 = vmatmul.mubr.bf16.gmra.mrb[0].mxu0 %v219
  %v354 = vpop.f32.mrb[0].mxu0
  %v355 = vadd.f32 0.0, %v354
  %v356 = vpop.f32.mrb[0].mxu0
  %v357 = vpop.f32.mrb[0].mxu0
  %v358 = vadd.f32 0.0, %v357
  %v359 = vpop.f32.mrb[0].mxu0
  %360 = vmatprep.mubr.bf16.mxu0 0
  %361 = vmatmul.mubr.bf16.gmra.mrb[0].mxu0 %v222
  %v362 = vpop.f32.mrb[0].mxu0
  %v363 = vadd.f32 0.0, %v362
  %v364 = vpop.f32.mrb[0].mxu0
  %v365 = vpop.f32.mrb[0].mxu0
  %v366 = vadd.f32 0.0, %v365
  %v367 = vpop.f32.mrb[0].mxu0
  %368 = vmatprep.mubr.bf16.mxu0 0
  %369 = vmatmul.mubr.bf16.gmra.mrb[0].mxu0 %v225
  %v370 = vpop.f32.mrb[0].mxu0
  %v371 = vadd.f32 0.0, %v370
  %v372 = vpop.f32.mrb[0].mxu0
  %v373 = vpop.f32.mrb[0].mxu0
  %v374 = vadd.f32 0.0, %v373
  %v375 = vpop.f32.mrb[0].mxu0
  %376 = vmatprep.mubr.bf16.mxu0 0
  %377 = vmatmul.mubr.bf16.gmra.mrb[0].mxu0 %v228
  %v378 = vpop.f32.mrb[0].mxu0
  %v379 = vadd.f32 0.0, %v378
  %v380 = vpop.f32.mrb[0].mxu0
  %v381 = vpop.f32.mrb[0].mxu0
  %v382 = vadd.f32 0.0, %v381
  %v383 = vpop.f32.mrb[0].mxu0
  %384 = vmatprep.mubr.bf16.mxu0 0
  %385 = vmatmul.mubr.bf16.gmra.mrb[0].mxu0 %v231
  %v386 = vpop.f32.mrb[0].mxu0
  %v387 = vadd.f32 0.0, %v386
  %v388 = vpop.f32.mrb[0].mxu0
  %v389 = vpop.f32.mrb[0].mxu0
  %v390 = vadd.f32 0.0, %v389
  %v391 = vpop.f32.mrb[0].mxu0
  %392 = vmatprep.mubr.bf16.mxu0 0
  %393 = vmatmul.mubr.bf16.gmra.mrb[0].mxu0 %v234
  %v394 = vpop.f32.mrb[0].mxu0
  %v395 = vadd.f32 0.0, %v394
  %v396 = vpop.f32.mrb[0].mxu0
  %v397 = vpop.f32.mrb[0].mxu0
  %v398 = vadd.f32 0.0, %v397
  %v399 = vpop.f32.mrb[0].mxu0
  %400 = vdwg.mxu0
  %433 = vrot.lane.b32.xlu0 %v275, 120
  %v434 = vpop.permute.xlu0 %433
  %435 = vrot.lane.b32.xlu0 %v278, 120
  %v436 = vpop.permute.xlu0 %435
  %437 = vrot.lane.b32.xlu0 %v283, 120
  %v438 = vpop.permute.xlu0 %437
  %439 = vrot.lane.b32.xlu0 %v286, 120
  %v440 = vpop.permute.xlu0 %439
  %441 = vrot.lane.b32.xlu0 %v291, 120
  %v442 = vpop.permute.xlu0 %441
  %443 = vrot.lane.b32.xlu0 %v294, 120
  %v444 = vpop.permute.xlu0 %443
  %445 = vrot.lane.b32.xlu0 %v299, 120
  %v446 = vpop.permute.xlu0 %445
  %447 = vrot.lane.b32.xlu0 %v302, 120
  %v448 = vpop.permute.xlu0 %447
  %449 = vrot.lane.b32.xlu0 %v307, 120
  %v450 = vpop.permute.xlu0 %449
  %451 = vrot.lane.b32.xlu0 %v310, 120
  %v452 = vpop.permute.xlu0 %451
  %453 = vrot.lane.b32.xlu0 %v315, 120
  %v454 = vpop.permute.xlu0 %453
  %455 = vrot.lane.b32.xlu0 %v318, 120
  %v456 = vpop.permute.xlu0 %455
  %457 = vrot.lane.b32.xlu0 %v323, 120
  %v458 = vpop.permute.xlu0 %457
  %459 = vrot.lane.b32.xlu0 %v326, 120
  %v460 = vpop.permute.xlu0 %459
  %461 = vrot.lane.b32.xlu0 %v331, 120
  %v462 = vpop.permute.xlu0 %461
  %463 = vrot.lane.b32.xlu0 %v334, 120
  %v464 = vpop.permute.xlu0 %463
  %465 = vrot.lane.b32.xlu0 %v339, 120
  %v466 = vpop.permute.xlu0 %465
  %467 = vrot.lane.b32.xlu0 %v342, 120
  %v468 = vpop.permute.xlu0 %467
  %469 = vrot.lane.b32.xlu0 %v347, 120
  %v470 = vpop.permute.xlu0 %469
  %471 = vrot.lane.b32.xlu0 %v350, 120
  %v472 = vpop.permute.xlu0 %471
  %473 = vrot.lane.b32.xlu0 %v355, 120
  %v474 = vpop.permute.xlu0 %473
  %475 = vrot.lane.b32.xlu0 %v358, 120
  %v476 = vpop.permute.xlu0 %475
  %477 = vrot.lane.b32.xlu0 %v363, 120
  %v478 = vpop.permute.xlu0 %477
  %479 = vrot.lane.b32.xlu0 %v366, 120
  %v480 = vpop.permute.xlu0 %479
  %481 = vrot.lane.b32.xlu0 %v371, 120
  %v482 = vpop.permute.xlu0 %481
  %483 = vrot.lane.b32.xlu0 %v374, 120
  %v484 = vpop.permute.xlu0 %483
  %485 = vrot.lane.b32.xlu0 %v379, 120
  %v486 = vpop.permute.xlu0 %485
  %487 = vrot.lane.b32.xlu0 %v382, 120
  %v488 = vpop.permute.xlu0 %487
  %489 = vrot.lane.b32.xlu0 %v387, 120
  %v490 = vpop.permute.xlu0 %489
  %491 = vrot.lane.b32.xlu0 %v390, 120
  %v492 = vpop.permute.xlu0 %491
  %493 = vrot.lane.b32.xlu0 %v395, 120
  %v494 = vpop.permute.xlu0 %493
  %495 = vrot.lane.b32.xlu0 %v398, 120
  %v496 = vpop.permute.xlu0 %495
  %v529 = vmax.f32 %v275, %v434
  %v530 = vmax.f32 %v278, %v436
  %v531 = vmax.f32 %v283, %v438
  %v532 = vmax.f32 %v286, %v440
  %v533 = vmax.f32 %v291, %v442
  %v534 = vmax.f32 %v294, %v444
  %v535 = vmax.f32 %v299, %v446
  %v536 = vmax.f32 %v302, %v448
  %v537 = vmax.f32 %v307, %v450
  %v538 = vmax.f32 %v310, %v452
  %v539 = vmax.f32 %v315, %v454
  %v540 = vmax.f32 %v318, %v456
  %v541 = vmax.f32 %v323, %v458
  %v542 = vmax.f32 %v326, %v460
  %v543 = vmax.f32 %v331, %v462
  %v544 = vmax.f32 %v334, %v464
  %v545 = vmax.f32 %v339, %v466
  %v546 = vmax.f32 %v342, %v468
  %v547 = vmax.f32 %v347, %v470
  %v548 = vmax.f32 %v350, %v472
  %v549 = vmax.f32 %v355, %v474
  %v550 = vmax.f32 %v358, %v476
  %v551 = vmax.f32 %v363, %v478
  %v552 = vmax.f32 %v366, %v480
  %v553 = vmax.f32 %v371, %v482
  %v554 = vmax.f32 %v374, %v484
  %v555 = vmax.f32 %v379, %v486
  %v556 = vmax.f32 %v382, %v488
  %v557 = vmax.f32 %v387, %v490
  %v558 = vmax.f32 %v390, %v492
  %v559 = vmax.f32 %v395, %v494
  %v560 = vmax.f32 %v398, %v496
  %561 = vrot.lane.b32.xlu0 %v275, 112
  %v562 = vpop.permute.xlu0 %561
  %563 = vrot.lane.b32.xlu0 %v278, 112
  %v564 = vpop.permute.xlu0 %563
  %565 = vrot.lane.b32.xlu0 %v283, 112
  %v566 = vpop.permute.xlu0 %565
  %567 = vrot.lane.b32.xlu0 %v286, 112
  %v568 = vpop.permute.xlu0 %567
  %569 = vrot.lane.b32.xlu0 %v291, 112
  %v570 = vpop.permute.xlu0 %569
  %571 = vrot.lane.b32.xlu0 %v294, 112
  %v572 = vpop.permute.xlu0 %571
  %573 = vrot.lane.b32.xlu0 %v299, 112
  %v574 = vpop.permute.xlu0 %573
  %575 = vrot.lane.b32.xlu0 %v302, 112
  %v576 = vpop.permute.xlu0 %575
  %577 = vrot.lane.b32.xlu0 %v307, 112
  %v578 = vpop.permute.xlu0 %577
  %579 = vrot.lane.b32.xlu0 %v310, 112
  %v580 = vpop.permute.xlu0 %579
  %581 = vrot.lane.b32.xlu0 %v315, 112
  %v582 = vpop.permute.xlu0 %581
  %583 = vrot.lane.b32.xlu0 %v318, 112
  %v584 = vpop.permute.xlu0 %583
  %585 = vrot.lane.b32.xlu0 %v323, 112
  %v586 = vpop.permute.xlu0 %585
  %587 = vrot.lane.b32.xlu0 %v326, 112
  %v588 = vpop.permute.xlu0 %587
  %589 = vrot.lane.b32.xlu0 %v331, 112
  %v590 = vpop.permute.xlu0 %589
  %591 = vrot.lane.b32.xlu0 %v334, 112
  %v592 = vpop.permute.xlu0 %591
  %593 = vrot.lane.b32.xlu0 %v339, 112
  %v594 = vpop.permute.xlu0 %593
  %595 = vrot.lane.b32.xlu0 %v342, 112
  %v596 = vpop.permute.xlu0 %595
  %597 = vrot.lane.b32.xlu0 %v347, 112
  %v598 = vpop.permute.xlu0 %597
  %599 = vrot.lane.b32.xlu0 %v350, 112
  %v600 = vpop.permute.xlu0 %599
  %601 = vrot.lane.b32.xlu0 %v355, 112
  %v602 = vpop.permute.xlu0 %601
  %603 = vrot.lane.b32.xlu0 %v358, 112
  %v604 = vpop.permute.xlu0 %603
  %605 = vrot.lane.b32.xlu0 %v363, 112
  %v606 = vpop.permute.xlu0 %605
  %607 = vrot.lane.b32.xlu0 %v366, 112
  %v608 = vpop.permute.xlu0 %607
  %609 = vrot.lane.b32.xlu0 %v371, 112
  %v610 = vpop.permute.xlu0 %609
  %611 = vrot.lane.b32.xlu0 %v374, 112
  %v612 = vpop.permute.xlu0 %611
  %613 = vrot.lane.b32.xlu0 %v379, 112
  %v614 = vpop.permute.xlu0 %613
  %615 = vrot.lane.b32.xlu0 %v382, 112
  %v616 = vpop.permute.xlu0 %615
  %617 = vrot.lane.b32.xlu0 %v387, 112
  %v618 = vpop.permute.xlu0 %617
  %619 = vrot.lane.b32.xlu0 %v390, 112
  %v620 = vpop.permute.xlu0 %619
  %621 = vrot.lane.b32.xlu0 %v395, 112
  %v622 = vpop.permute.xlu0 %621
  %623 = vrot.lane.b32.xlu0 %v398, 112
  %v624 = vpop.permute.xlu0 %623
  %v657 = vmax.f32 %v529, %v562
  %v658 = vmax.f32 %v530, %v564
  %v659 = vmax.f32 %v531, %v566
  %v660 = vmax.f32 %v532, %v568
  %v661 = vmax.f32 %v533, %v570
  %v662 = vmax.f32 %v534, %v572
  %v663 = vmax.f32 %v535, %v574
  %v664 = vmax.f32 %v536, %v576
  %v665 = vmax.f32 %v537, %v578
  %v666 = vmax.f32 %v538, %v580
  %v667 = vmax.f32 %v539, %v582
  %v668 = vmax.f32 %v540, %v584
  %v669 = vmax.f32 %v541, %v586
  %v670 = vmax.f32 %v542, %v588
  %v671 = vmax.f32 %v543, %v590
  %v672 = vmax.f32 %v544, %v592
  %v673 = vmax.f32 %v545, %v594
  %v674 = vmax.f32 %v546, %v596
  %v675 = vmax.f32 %v547, %v598
  %v676 = vmax.f32 %v548, %v600
  %v677 = vmax.f32 %v549, %v602
  %v678 = vmax.f32 %v550, %v604
  %v679 = vmax.f32 %v551, %v606
  %v680 = vmax.f32 %v552, %v608
  %v681 = vmax.f32 %v553, %v610
  %v682 = vmax.f32 %v554, %v612
  %v683 = vmax.f32 %v555, %v614
  %v684 = vmax.f32 %v556, %v616
  %v685 = vmax.f32 %v557, %v618
  %v686 = vmax.f32 %v558, %v620
  %v687 = vmax.f32 %v559, %v622
  %v688 = vmax.f32 %v560, %v624
  %689 = vrot.lane.b32.xlu0 %v275, 104
  %v690 = vpop.permute.xlu0 %689
  %691 = vrot.lane.b32.xlu0 %v278, 104
  %v692 = vpop.permute.xlu0 %691
  %693 = vrot.lane.b32.xlu0 %v283, 104
  %v694 = vpop.permute.xlu0 %693
  %695 = vrot.lane.b32.xlu0 %v286, 104
  %v696 = vpop.permute.xlu0 %695
  %697 = vrot.lane.b32.xlu0 %v291, 104
  %v698 = vpop.permute.xlu0 %697
  %699 = vrot.lane.b32.xlu0 %v294, 104
  %v700 = vpop.permute.xlu0 %699
  %701 = vrot.lane.b32.xlu0 %v299, 104
  %v702 = vpop.permute.xlu0 %701
  %703 = vrot.lane.b32.xlu0 %v302, 104
  %v704 = vpop.permute.xlu0 %703
  %705 = vrot.lane.b32.xlu0 %v307, 104
  %v706 = vpop.permute.xlu0 %705
  %707 = vrot.lane.b32.xlu0 %v310, 104
  %v708 = vpop.permute.xlu0 %707
  %709 = vrot.lane.b32.xlu0 %v315, 104
  %v710 = vpop.permute.xlu0 %709
  %711 = vrot.lane.b32.xlu0 %v318, 104
  %v712 = vpop.permute.xlu0 %711
  %713 = vrot.lane.b32.xlu0 %v323, 104
  %v714 = vpop.permute.xlu0 %713
  %715 = vrot.lane.b32.xlu0 %v326, 104
  %v716 = vpop.permute.xlu0 %715
  %717 = vrot.lane.b32.xlu0 %v331, 104
  %v718 = vpop.permute.xlu0 %717
  %719 = vrot.lane.b32.xlu0 %v334, 104
  %v720 = vpop.permute.xlu0 %719
  %721 = vrot.lane.b32.xlu0 %v339, 104
  %v722 = vpop.permute.xlu0 %721
  %723 = vrot.lane.b32.xlu0 %v342, 104
  %v724 = vpop.permute.xlu0 %723
  %725 = vrot.lane.b32.xlu0 %v347, 104
  %v726 = vpop.permute.xlu0 %725
  %727 = vrot.lane.b32.xlu0 %v350, 104
  %v728 = vpop.permute.xlu0 %727
  %729 = vrot.lane.b32.xlu0 %v355, 104
  %v730 = vpop.permute.xlu0 %729
  %731 = vrot.lane.b32.xlu0 %v358, 104
  %v732 = vpop.permute.xlu0 %731
  %733 = vrot.lane.b32.xlu0 %v363, 104
  %v734 = vpop.permute.xlu0 %733
  %735 = vrot.lane.b32.xlu0 %v366, 104
  %v736 = vpop.permute.xlu0 %735
  %737 = vrot.lane.b32.xlu0 %v371, 104
  %v738 = vpop.permute.xlu0 %737
  %739 = vrot.lane.b32.xlu0 %v374, 104
  %v740 = vpop.permute.xlu0 %739
  %741 = vrot.lane.b32.xlu0 %v379, 104
  %v742 = vpop.permute.xlu0 %741
  %743 = vrot.lane.b32.xlu0 %v382, 104
  %v744 = vpop.permute.xlu0 %743
  %745 = vrot.lane.b32.xlu0 %v387, 104
  %v746 = vpop.permute.xlu0 %745
  %747 = vrot.lane.b32.xlu0 %v390, 104
  %v748 = vpop.permute.xlu0 %747
  %749 = vrot.lane.b32.xlu0 %v395, 104
  %v750 = vpop.permute.xlu0 %749
  %751 = vrot.lane.b32.xlu0 %v398, 104
  %v752 = vpop.permute.xlu0 %751
  %v785 = vmax.f32 %v657, %v690
  %v786 = vmax.f32 %v658, %v692
  %v787 = vmax.f32 %v659, %v694
  %v788 = vmax.f32 %v660, %v696
  %v789 = vmax.f32 %v661, %v698
  %v790 = vmax.f32 %v662, %v700
  %v791 = vmax.f32 %v663, %v702
  %v792 = vmax.f32 %v664, %v704
  %v793 = vmax.f32 %v665, %v706
  %v794 = vmax.f32 %v666, %v708
  %v795 = vmax.f32 %v667, %v710
  %v796 = vmax.f32 %v668, %v712
  %v797 = vmax.f32 %v669, %v714
  %v798 = vmax.f32 %v670, %v716
  %v799 = vmax.f32 %v671, %v718
  %v800 = vmax.f32 %v672, %v720
  %v801 = vmax.f32 %v673, %v722
  %v802 = vmax.f32 %v674, %v724
  %v803 = vmax.f32 %v675, %v726
  %v804 = vmax.f32 %v676, %v728
  %v805 = vmax.f32 %v677, %v730
  %v806 = vmax.f32 %v678, %v732
  %v807 = vmax.f32 %v679, %v734
  %v808 = vmax.f32 %v680, %v736
  %v809 = vmax.f32 %v681, %v738
  %v810 = vmax.f32 %v682, %v740
  %v811 = vmax.f32 %v683, %v742
  %v812 = vmax.f32 %v684, %v744
  %v813 = vmax.f32 %v685, %v746
  %v814 = vmax.f32 %v686, %v748
  %v815 = vmax.f32 %v687, %v750
  %v816 = vmax.f32 %v688, %v752
  %817 = vrot.lane.b32.xlu0 %v275, 96
  %v818 = vpop.permute.xlu0 %817
  %819 = vrot.lane.b32.xlu0 %v278, 96
  %v820 = vpop.permute.xlu0 %819
  %821 = vrot.lane.b32.xlu0 %v283, 96
  %v822 = vpop.permute.xlu0 %821
  %823 = vrot.lane.b32.xlu0 %v286, 96
  %v824 = vpop.permute.xlu0 %823
  %825 = vrot.lane.b32.xlu0 %v291, 96
  %v826 = vpop.permute.xlu0 %825
  %827 = vrot.lane.b32.xlu0 %v294, 96
  %v828 = vpop.permute.xlu0 %827
  %829 = vrot.lane.b32.xlu0 %v299, 96
  %v830 = vpop.permute.xlu0 %829
  %831 = vrot.lane.b32.xlu0 %v302, 96
  %v832 = vpop.permute.xlu0 %831
  %833 = vrot.lane.b32.xlu0 %v307, 96
  %v834 = vpop.permute.xlu0 %833
  %835 = vrot.lane.b32.xlu0 %v310, 96
  %v836 = vpop.permute.xlu0 %835
  %837 = vrot.lane.b32.xlu0 %v315, 96
  %v838 = vpop.permute.xlu0 %837
  %839 = vrot.lane.b32.xlu0 %v318, 96
  %v840 = vpop.permute.xlu0 %839
  %841 = vrot.lane.b32.xlu0 %v323, 96
  %v842 = vpop.permute.xlu0 %841
  %843 = vrot.lane.b32.xlu0 %v326, 96
  %v844 = vpop.permute.xlu0 %843
  %845 = vrot.lane.b32.xlu0 %v331, 96
  %v846 = vpop.permute.xlu0 %845
  %847 = vrot.lane.b32.xlu0 %v334, 96
  %v848 = vpop.permute.xlu0 %847
  %849 = vrot.lane.b32.xlu0 %v339, 96
  %v850 = vpop.permute.xlu0 %849
  %851 = vrot.lane.b32.xlu0 %v342, 96
  %v852 = vpop.permute.xlu0 %851
  %853 = vrot.lane.b32.xlu0 %v347, 96
  %v854 = vpop.permute.xlu0 %853
  %855 = vrot.lane.b32.xlu0 %v350, 96
  %v856 = vpop.permute.xlu0 %855
  %857 = vrot.lane.b32.xlu0 %v355, 96
  %v858 = vpop.permute.xlu0 %857
  %859 = vrot.lane.b32.xlu0 %v358, 96
  %v860 = vpop.permute.xlu0 %859
  %861 = vrot.lane.b32.xlu0 %v363, 96
  %v862 = vpop.permute.xlu0 %861
  %863 = vrot.lane.b32.xlu0 %v366, 96
  %v864 = vpop.permute.xlu0 %863
  %865 = vrot.lane.b32.xlu0 %v371, 96
  %v866 = vpop.permute.xlu0 %865
  %867 = vrot.lane.b32.xlu0 %v374, 96
  %v868 = vpop.permute.xlu0 %867
  %869 = vrot.lane.b32.xlu0 %v379, 96
  %v870 = vpop.permute.xlu0 %869
  %871 = vrot.lane.b32.xlu0 %v382, 96
  %v872 = vpop.permute.xlu0 %871
  %873 = vrot.lane.b32.xlu0 %v387, 96
  %v874 = vpop.permute.xlu0 %873
  %875 = vrot.lane.b32.xlu0 %v390, 96
  %v876 = vpop.permute.xlu0 %875
  %877 = vrot.lane.b32.xlu0 %v395, 96
  %v878 = vpop.permute.xlu0 %877
  %879 = vrot.lane.b32.xlu0 %v398, 96
  %v880 = vpop.permute.xlu0 %879
  %v913 = vmax.f32 %v785, %v818
  %v914 = vmax.f32 %v786, %v820
  %v915 = vmax.f32 %v787, %v822
  %v916 = vmax.f32 %v788, %v824
  %v917 = vmax.f32 %v789, %v826
  %v918 = vmax.f32 %v790, %v828
  %v919 = vmax.f32 %v791, %v830
  %v920 = vmax.f32 %v792, %v832
  %v921 = vmax.f32 %v793, %v834
  %v922 = vmax.f32 %v794, %v836
  %v923 = vmax.f32 %v795, %v838
  %v924 = vmax.f32 %v796, %v840
  %v925 = vmax.f32 %v797, %v842
  %v926 = vmax.f32 %v798, %v844
  %v927 = vmax.f32 %v799, %v846
  %v928 = vmax.f32 %v800, %v848
  %v929 = vmax.f32 %v801, %v850
  %v930 = vmax.f32 %v802, %v852
  %v931 = vmax.f32 %v803, %v854
  %v932 = vmax.f32 %v804, %v856
  %v933 = vmax.f32 %v805, %v858
  %v934 = vmax.f32 %v806, %v860
  %v935 = vmax.f32 %v807, %v862
  %v936 = vmax.f32 %v808, %v864
  %v937 = vmax.f32 %v809, %v866
  %v938 = vmax.f32 %v810, %v868
  %v939 = vmax.f32 %v811, %v870
  %v940 = vmax.f32 %v812, %v872
  %v941 = vmax.f32 %v813, %v874
  %v942 = vmax.f32 %v814, %v876
  %v943 = vmax.f32 %v815, %v878
  %v944 = vmax.f32 %v816, %v880
  %945 = vrot.lane.b32.xlu0 %v275, 88
  %v946 = vpop.permute.xlu0 %945
  %947 = vrot.lane.b32.xlu0 %v278, 88
  %v948 = vpop.permute.xlu0 %947
  %949 = vrot.lane.b32.xlu0 %v283, 88
  %v950 = vpop.permute.xlu0 %949
  %951 = vrot.lane.b32.xlu0 %v286, 88
  %v952 = vpop.permute.xlu0 %951
  %953 = vrot.lane.b32.xlu0 %v291, 88
  %v954 = vpop.permute.xlu0 %953
  %955 = vrot.lane.b32.xlu0 %v294, 88
  %v956 = vpop.permute.xlu0 %955
  %957 = vrot.lane.b32.xlu0 %v299, 88
  %v958 = vpop.permute.xlu0 %957
  %959 = vrot.lane.b32.xlu0 %v302, 88
  %v960 = vpop.permute.xlu0 %959
  %961 = vrot.lane.b32.xlu0 %v307, 88
  %v962 = vpop.permute.xlu0 %961
  %963 = vrot.lane.b32.xlu0 %v310, 88
  %v964 = vpop.permute.xlu0 %963
  %965 = vrot.lane.b32.xlu0 %v315, 88
  %v966 = vpop.permute.xlu0 %965
  %967 = vrot.lane.b32.xlu0 %v318, 88
  %v968 = vpop.permute.xlu0 %967
  %969 = vrot.lane.b32.xlu0 %v323, 88
  %v970 = vpop.permute.xlu0 %969
  %971 = vrot.lane.b32.xlu0 %v326, 88
  %v972 = vpop.permute.xlu0 %971
  %973 = vrot.lane.b32.xlu0 %v331, 88
  %v974 = vpop.permute.xlu0 %973
  %975 = vrot.lane.b32.xlu0 %v334, 88
  %v976 = vpop.permute.xlu0 %975
  %977 = vrot.lane.b32.xlu0 %v339, 88
  %v978 = vpop.permute.xlu0 %977
  %979 = vrot.lane.b32.xlu0 %v342, 88
  %v980 = vpop.permute.xlu0 %979
  %981 = vrot.lane.b32.xlu0 %v347, 88
  %v982 = vpop.permute.xlu0 %981
  %983 = vrot.lane.b32.xlu0 %v350, 88
  %v984 = vpop.permute.xlu0 %983
  %985 = vrot.lane.b32.xlu0 %v355, 88
  %v986 = vpop.permute.xlu0 %985
  %987 = vrot.lane.b32.xlu0 %v358, 88
  %v988 = vpop.permute.xlu0 %987
  %989 = vrot.lane.b32.xlu0 %v363, 88
  %v990 = vpop.permute.xlu0 %989
  %991 = vrot.lane.b32.xlu0 %v366, 88
  %v992 = vpop.permute.xlu0 %991
  %993 = vrot.lane.b32.xlu0 %v371, 88
  %v994 = vpop.permute.xlu0 %993
  %995 = vrot.lane.b32.xlu0 %v374, 88
  %v996 = vpop.permute.xlu0 %995
  %997 = vrot.lane.b32.xlu0 %v379, 88
  %v998 = vpop.permute.xlu0 %997
  %999 = vrot.lane.b32.xlu0 %v382, 88
  %v1000 = vpop.permute.xlu0 %999
  %1001 = vrot.lane.b32.xlu0 %v387, 88
  %v1002 = vpop.permute.xlu0 %1001
  %1003 = vrot.lane.b32.xlu0 %v390, 88
  %v1004 = vpop.permute.xlu0 %1003
  %1005 = vrot.lane.b32.xlu0 %v395, 88
  %v1006 = vpop.permute.xlu0 %1005
  %1007 = vrot.lane.b32.xlu0 %v398, 88
  %v1008 = vpop.permute.xlu0 %1007
  %v1041 = vmax.f32 %v913, %v946
  %v1042 = vmax.f32 %v914, %v948
  %v1043 = vmax.f32 %v915, %v950
  %v1044 = vmax.f32 %v916, %v952
  %v1045 = vmax.f32 %v917, %v954
  %v1046 = vmax.f32 %v918, %v956
  %v1047 = vmax.f32 %v919, %v958
  %v1048 = vmax.f32 %v920, %v960
  %v1049 = vmax.f32 %v921, %v962
  %v1050 = vmax.f32 %v922, %v964
  %v1051 = vmax.f32 %v923, %v966
  %v1052 = vmax.f32 %v924, %v968
  %v1053 = vmax.f32 %v925, %v970
  %v1054 = vmax.f32 %v926, %v972
  %v1055 = vmax.f32 %v927, %v974
  %v1056 = vmax.f32 %v928, %v976
  %v1057 = vmax.f32 %v929, %v978
  %v1058 = vmax.f32 %v930, %v980
  %v1059 = vmax.f32 %v931, %v982
  %v1060 = vmax.f32 %v932, %v984
  %v1061 = vmax.f32 %v933, %v986
  %v1062 = vmax.f32 %v934, %v988
  %v1063 = vmax.f32 %v935, %v990
  %v1064 = vmax.f32 %v936, %v992
  %v1065 = vmax.f32 %v937, %v994
  %v1066 = vmax.f32 %v938, %v996
  %v1067 = vmax.f32 %v939, %v998
  %v1068 = vmax.f32 %v940, %v1000
  %v1069 = vmax.f32 %v941, %v1002
  %v1070 = vmax.f32 %v942, %v1004
  %v1071 = vmax.f32 %v943, %v1006
  %v1072 = vmax.f32 %v944, %v1008
  %1073 = vrot.lane.b32.xlu0 %v275, 80
  %v1074 = vpop.permute.xlu0 %1073
  %1075 = vrot.lane.b32.xlu0 %v278, 80
  %v1076 = vpop.permute.xlu0 %1075
  %1077 = vrot.lane.b32.xlu0 %v283, 80
  %v1078 = vpop.permute.xlu0 %1077
  %1079 = vrot.lane.b32.xlu0 %v286, 80
  %v1080 = vpop.permute.xlu0 %1079
  %1081 = vrot.lane.b32.xlu0 %v291, 80
  %v1082 = vpop.permute.xlu0 %1081
  %1083 = vrot.lane.b32.xlu0 %v294, 80
  %v1084 = vpop.permute.xlu0 %1083
  %1085 = vrot.lane.b32.xlu0 %v299, 80
  %v1086 = vpop.permute.xlu0 %1085
  %1087 = vrot.lane.b32.xlu0 %v302, 80
  %v1088 = vpop.permute.xlu0 %1087
  %1089 = vrot.lane.b32.xlu0 %v307, 80
  %v1090 = vpop.permute.xlu0 %1089
  %1091 = vrot.lane.b32.xlu0 %v310, 80
  %v1092 = vpop.permute.xlu0 %1091
  %1093 = vrot.lane.b32.xlu0 %v315, 80
  %v1094 = vpop.permute.xlu0 %1093
  %1095 = vrot.lane.b32.xlu0 %v318, 80
  %v1096 = vpop.permute.xlu0 %1095
  %1097 = vrot.lane.b32.xlu0 %v323, 80
  %v1098 = vpop.permute.xlu0 %1097
  %1099 = vrot.lane.b32.xlu0 %v326, 80
  %v1100 = vpop.permute.xlu0 %1099
  %1101 = vrot.lane.b32.xlu0 %v331, 80
  %v1102 = vpop.permute.xlu0 %1101
  %1103 = vrot.lane.b32.xlu0 %v334, 80
  %v1104 = vpop.permute.xlu0 %1103
  %1105 = vrot.lane.b32.xlu0 %v339, 80
  %v1106 = vpop.permute.xlu0 %1105
  %1107 = vrot.lane.b32.xlu0 %v342, 80
  %v1108 = vpop.permute.xlu0 %1107
  %1109 = vrot.lane.b32.xlu0 %v347, 80
  %v1110 = vpop.permute.xlu0 %1109
  %1111 = vrot.lane.b32.xlu0 %v350, 80
  %v1112 = vpop.permute.xlu0 %1111
  %1113 = vrot.lane.b32.xlu0 %v355, 80
  %v1114 = vpop.permute.xlu0 %1113
  %1115 = vrot.lane.b32.xlu0 %v358, 80
  %v1116 = vpop.permute.xlu0 %1115
  %1117 = vrot.lane.b32.xlu0 %v363, 80
  %v1118 = vpop.permute.xlu0 %1117
  %1119 = vrot.lane.b32.xlu0 %v366, 80
  %v1120 = vpop.permute.xlu0 %1119
  %1121 = vrot.lane.b32.xlu0 %v371, 80
  %v1122 = vpop.permute.xlu0 %1121
  %1123 = vrot.lane.b32.xlu0 %v374, 80
  %v1124 = vpop.permute.xlu0 %1123
  %1125 = vrot.lane.b32.xlu0 %v379, 80
  %v1126 = vpop.permute.xlu0 %1125
  %1127 = vrot.lane.b32.xlu0 %v382, 80
  %v1128 = vpop.permute.xlu0 %1127
  %1129 = vrot.lane.b32.xlu0 %v387, 80
  %v1130 = vpop.permute.xlu0 %1129
  %1131 = vrot.lane.b32.xlu0 %v390, 80
  %v1132 = vpop.permute.xlu0 %1131
  %1133 = vrot.lane.b32.xlu0 %v395, 80
  %v1134 = vpop.permute.xlu0 %1133
  %1135 = vrot.lane.b32.xlu0 %v398, 80
  %v1136 = vpop.permute.xlu0 %1135
  %v1169 = vmax.f32 %v1041, %v1074
  %v1170 = vmax.f32 %v1042, %v1076
  %v1171 = vmax.f32 %v1043, %v1078
  %v1172 = vmax.f32 %v1044, %v1080
  %v1173 = vmax.f32 %v1045, %v1082
  %v1174 = vmax.f32 %v1046, %v1084
  %v1175 = vmax.f32 %v1047, %v1086
  %v1176 = vmax.f32 %v1048, %v1088
  %v1177 = vmax.f32 %v1049, %v1090
  %v1178 = vmax.f32 %v1050, %v1092
  %v1179 = vmax.f32 %v1051, %v1094
  %v1180 = vmax.f32 %v1052, %v1096
  %v1181 = vmax.f32 %v1053, %v1098
  %v1182 = vmax.f32 %v1054, %v1100
  %v1183 = vmax.f32 %v1055, %v1102
  %v1184 = vmax.f32 %v1056, %v1104
  %v1185 = vmax.f32 %v1057, %v1106
  %v1186 = vmax.f32 %v1058, %v1108
  %v1187 = vmax.f32 %v1059, %v1110
  %v1188 = vmax.f32 %v1060, %v1112
  %v1189 = vmax.f32 %v1061, %v1114
  %v1190 = vmax.f32 %v1062, %v1116
  %v1191 = vmax.f32 %v1063, %v1118
  %v1192 = vmax.f32 %v1064, %v1120
  %v1193 = vmax.f32 %v1065, %v1122
  %v1194 = vmax.f32 %v1066, %v1124
  %v1195 = vmax.f32 %v1067, %v1126
  %v1196 = vmax.f32 %v1068, %v1128
  %v1197 = vmax.f32 %v1069, %v1130
  %v1198 = vmax.f32 %v1070, %v1132
  %v1199 = vmax.f32 %v1071, %v1134
  %v1200 = vmax.f32 %v1072, %v1136
  %1201 = vrot.lane.b32.xlu0 %v275, 72
  %v1202 = vpop.permute.xlu0 %1201
  %1203 = vrot.lane.b32.xlu0 %v278, 72
  %v1204 = vpop.permute.xlu0 %1203
  %1205 = vrot.lane.b32.xlu0 %v283, 72
  %v1206 = vpop.permute.xlu0 %1205
  %1207 = vrot.lane.b32.xlu0 %v286, 72
  %v1208 = vpop.permute.xlu0 %1207
  %1209 = vrot.lane.b32.xlu0 %v291, 72
  %v1210 = vpop.permute.xlu0 %1209
  %1211 = vrot.lane.b32.xlu0 %v294, 72
  %v1212 = vpop.permute.xlu0 %1211
  %1213 = vrot.lane.b32.xlu0 %v299, 72
  %v1214 = vpop.permute.xlu0 %1213
  %1215 = vrot.lane.b32.xlu0 %v302, 72
  %v1216 = vpop.permute.xlu0 %1215
  %1217 = vrot.lane.b32.xlu0 %v307, 72
  %v1218 = vpop.permute.xlu0 %1217
  %1219 = vrot.lane.b32.xlu0 %v310, 72
  %v1220 = vpop.permute.xlu0 %1219
  %1221 = vrot.lane.b32.xlu0 %v315, 72
  %v1222 = vpop.permute.xlu0 %1221
  %1223 = vrot.lane.b32.xlu0 %v318, 72
  %v1224 = vpop.permute.xlu0 %1223
  %1225 = vrot.lane.b32.xlu0 %v323, 72
  %v1226 = vpop.permute.xlu0 %1225
  %1227 = vrot.lane.b32.xlu0 %v326, 72
  %v1228 = vpop.permute.xlu0 %1227
  %1229 = vrot.lane.b32.xlu0 %v331, 72
  %v1230 = vpop.permute.xlu0 %1229
  %1231 = vrot.lane.b32.xlu0 %v334, 72
  %v1232 = vpop.permute.xlu0 %1231
  %1233 = vrot.lane.b32.xlu0 %v339, 72
  %v1234 = vpop.permute.xlu0 %1233
  %1235 = vrot.lane.b32.xlu0 %v342, 72
  %v1236 = vpop.permute.xlu0 %1235
  %1237 = vrot.lane.b32.xlu0 %v347, 72
  %v1238 = vpop.permute.xlu0 %1237
  %1239 = vrot.lane.b32.xlu0 %v350, 72
  %v1240 = vpop.permute.xlu0 %1239
  %1241 = vrot.lane.b32.xlu0 %v355, 72
  %v1242 = vpop.permute.xlu0 %1241
  %1243 = vrot.lane.b32.xlu0 %v358, 72
  %v1244 = vpop.permute.xlu0 %1243
  %1245 = vrot.lane.b32.xlu0 %v363, 72
  %v1246 = vpop.permute.xlu0 %1245
  %1247 = vrot.lane.b32.xlu0 %v366, 72
  %v1248 = vpop.permute.xlu0 %1247
  %1249 = vrot.lane.b32.xlu0 %v371, 72
  %v1250 = vpop.permute.xlu0 %1249
  %1251 = vrot.lane.b32.xlu0 %v374, 72
  %v1252 = vpop.permute.xlu0 %1251
  %1253 = vrot.lane.b32.xlu0 %v379, 72
  %v1254 = vpop.permute.xlu0 %1253
  %1255 = vrot.lane.b32.xlu0 %v382, 72
  %v1256 = vpop.permute.xlu0 %1255
  %1257 = vrot.lane.b32.xlu0 %v387, 72
  %v1258 = vpop.permute.xlu0 %1257
  %1259 = vrot.lane.b32.xlu0 %v390, 72
  %v1260 = vpop.permute.xlu0 %1259
  %1261 = vrot.lane.b32.xlu0 %v395, 72
  %v1262 = vpop.permute.xlu0 %1261
  %1263 = vrot.lane.b32.xlu0 %v398, 72
  %v1264 = vpop.permute.xlu0 %1263
  %v1297 = vmax.f32 %v1169, %v1202
  %v1298 = vmax.f32 %v1170, %v1204
  %v1299 = vmax.f32 %v1171, %v1206
  %v1300 = vmax.f32 %v1172, %v1208
  %v1301 = vmax.f32 %v1173, %v1210
  %v1302 = vmax.f32 %v1174, %v1212
  %v1303 = vmax.f32 %v1175, %v1214
  %v1304 = vmax.f32 %v1176, %v1216
  %v1305 = vmax.f32 %v1177, %v1218
  %v1306 = vmax.f32 %v1178, %v1220
  %v1307 = vmax.f32 %v1179, %v1222
  %v1308 = vmax.f32 %v1180, %v1224
  %v1309 = vmax.f32 %v1181, %v1226
  %v1310 = vmax.f32 %v1182, %v1228
  %v1311 = vmax.f32 %v1183, %v1230
  %v1312 = vmax.f32 %v1184, %v1232
  %v1313 = vmax.f32 %v1185, %v1234
  %v1314 = vmax.f32 %v1186, %v1236
  %v1315 = vmax.f32 %v1187, %v1238
  %v1316 = vmax.f32 %v1188, %v1240
  %v1317 = vmax.f32 %v1189, %v1242
  %v1318 = vmax.f32 %v1190, %v1244
  %v1319 = vmax.f32 %v1191, %v1246
  %v1320 = vmax.f32 %v1192, %v1248
  %v1321 = vmax.f32 %v1193, %v1250
  %v1322 = vmax.f32 %v1194, %v1252
  %v1323 = vmax.f32 %v1195, %v1254
  %v1324 = vmax.f32 %v1196, %v1256
  %v1325 = vmax.f32 %v1197, %v1258
  %v1326 = vmax.f32 %v1198, %v1260
  %v1327 = vmax.f32 %v1199, %v1262
  %v1328 = vmax.f32 %v1200, %v1264
  %1329 = vrot.lane.b32.xlu0 %v275, 64
  %v1330 = vpop.permute.xlu0 %1329
  %1331 = vrot.lane.b32.xlu0 %v278, 64
  %v1332 = vpop.permute.xlu0 %1331
  %1333 = vrot.lane.b32.xlu0 %v283, 64
  %v1334 = vpop.permute.xlu0 %1333
  %1335 = vrot.lane.b32.xlu0 %v286, 64
  %v1336 = vpop.permute.xlu0 %1335
  %1337 = vrot.lane.b32.xlu0 %v291, 64
  %v1338 = vpop.permute.xlu0 %1337
  %1339 = vrot.lane.b32.xlu0 %v294, 64
  %v1340 = vpop.permute.xlu0 %1339
  %1341 = vrot.lane.b32.xlu0 %v299, 64
  %v1342 = vpop.permute.xlu0 %1341
  %1343 = vrot.lane.b32.xlu0 %v302, 64
  %v1344 = vpop.permute.xlu0 %1343
  %1345 = vrot.lane.b32.xlu0 %v307, 64
  %v1346 = vpop.permute.xlu0 %1345
  %1347 = vrot.lane.b32.xlu0 %v310, 64
  %v1348 = vpop.permute.xlu0 %1347
  %1349 = vrot.lane.b32.xlu0 %v315, 64
  %v1350 = vpop.permute.xlu0 %1349
  %1351 = vrot.lane.b32.xlu0 %v318, 64
  %v1352 = vpop.permute.xlu0 %1351
  %1353 = vrot.lane.b32.xlu0 %v323, 64
  %v1354 = vpop.permute.xlu0 %1353
  %1355 = vrot.lane.b32.xlu0 %v326, 64
  %v1356 = vpop.permute.xlu0 %1355
  %1357 = vrot.lane.b32.xlu0 %v331, 64
  %v1358 = vpop.permute.xlu0 %1357
  %1359 = vrot.lane.b32.xlu0 %v334, 64
  %v1360 = vpop.permute.xlu0 %1359
  %1361 = vrot.lane.b32.xlu0 %v339, 64
  %v1362 = vpop.permute.xlu0 %1361
  %1363 = vrot.lane.b32.xlu0 %v342, 64
  %v1364 = vpop.permute.xlu0 %1363
  %1365 = vrot.lane.b32.xlu0 %v347, 64
  %v1366 = vpop.permute.xlu0 %1365
  %1367 = vrot.lane.b32.xlu0 %v350, 64
  %v1368 = vpop.permute.xlu0 %1367
  %1369 = vrot.lane.b32.xlu0 %v355, 64
  %v1370 = vpop.permute.xlu0 %1369
  %1371 = vrot.lane.b32.xlu0 %v358, 64
  %v1372 = vpop.permute.xlu0 %1371
  %1373 = vrot.lane.b32.xlu0 %v363, 64
  %v1374 = vpop.permute.xlu0 %1373
  %1375 = vrot.lane.b32.xlu0 %v366, 64
  %v1376 = vpop.permute.xlu0 %1375
  %1377 = vrot.lane.b32.xlu0 %v371, 64
  %v1378 = vpop.permute.xlu0 %1377
  %1379 = vrot.lane.b32.xlu0 %v374, 64
  %v1380 = vpop.permute.xlu0 %1379
  %1381 = vrot.lane.b32.xlu0 %v379, 64
  %v1382 = vpop.permute.xlu0 %1381
  %1383 = vrot.lane.b32.xlu0 %v382, 64
  %v1384 = vpop.permute.xlu0 %1383
  %1385 = vrot.lane.b32.xlu0 %v387, 64
  %v1386 = vpop.permute.xlu0 %1385
  %1387 = vrot.lane.b32.xlu0 %v390, 64
  %v1388 = vpop.permute.xlu0 %1387
  %1389 = vrot.lane.b32.xlu0 %v395, 64
  %v1390 = vpop.permute.xlu0 %1389
  %1391 = vrot.lane.b32.xlu0 %v398, 64
  %v1392 = vpop.permute.xlu0 %1391
  %v1425 = vmax.f32 %v1297, %v1330
  %v1426 = vmax.f32 %v1298, %v1332
  %v1427 = vmax.f32 %v1299, %v1334
  %v1428 = vmax.f32 %v1300, %v1336
  %v1429 = vmax.f32 %v1301, %v1338
  %v1430 = vmax.f32 %v1302, %v1340
  %v1431 = vmax.f32 %v1303, %v1342
  %v1432 = vmax.f32 %v1304, %v1344
  %v1433 = vmax.f32 %v1305, %v1346
  %v1434 = vmax.f32 %v1306, %v1348
  %v1435 = vmax.f32 %v1307, %v1350
  %v1436 = vmax.f32 %v1308, %v1352
  %v1437 = vmax.f32 %v1309, %v1354
  %v1438 = vmax.f32 %v1310, %v1356
  %v1439 = vmax.f32 %v1311, %v1358
  %v1440 = vmax.f32 %v1312, %v1360
  %v1441 = vmax.f32 %v1313, %v1362
  %v1442 = vmax.f32 %v1314, %v1364
  %v1443 = vmax.f32 %v1315, %v1366
  %v1444 = vmax.f32 %v1316, %v1368
  %v1445 = vmax.f32 %v1317, %v1370
  %v1446 = vmax.f32 %v1318, %v1372
  %v1447 = vmax.f32 %v1319, %v1374
  %v1448 = vmax.f32 %v1320, %v1376
  %v1449 = vmax.f32 %v1321, %v1378
  %v1450 = vmax.f32 %v1322, %v1380
  %v1451 = vmax.f32 %v1323, %v1382
  %v1452 = vmax.f32 %v1324, %v1384
  %v1453 = vmax.f32 %v1325, %v1386
  %v1454 = vmax.f32 %v1326, %v1388
  %v1455 = vmax.f32 %v1327, %v1390
  %v1456 = vmax.f32 %v1328, %v1392
  %1457 = vrot.lane.b32.xlu0 %v275, 56
  %v1458 = vpop.permute.xlu0 %1457
  %1459 = vrot.lane.b32.xlu0 %v278, 56
  %v1460 = vpop.permute.xlu0 %1459
  %1461 = vrot.lane.b32.xlu0 %v283, 56
  %v1462 = vpop.permute.xlu0 %1461
  %1463 = vrot.lane.b32.xlu0 %v286, 56
  %v1464 = vpop.permute.xlu0 %1463
  %1465 = vrot.lane.b32.xlu0 %v291, 56
  %v1466 = vpop.permute.xlu0 %1465
  %1467 = vrot.lane.b32.xlu0 %v294, 56
  %v1468 = vpop.permute.xlu0 %1467
  %1469 = vrot.lane.b32.xlu0 %v299, 56
  %v1470 = vpop.permute.xlu0 %1469
  %1471 = vrot.lane.b32.xlu0 %v302, 56
  %v1472 = vpop.permute.xlu0 %1471
  %1473 = vrot.lane.b32.xlu0 %v307, 56
  %v1474 = vpop.permute.xlu0 %1473
  %1475 = vrot.lane.b32.xlu0 %v310, 56
  %v1476 = vpop.permute.xlu0 %1475
  %1477 = vrot.lane.b32.xlu0 %v315, 56
  %v1478 = vpop.permute.xlu0 %1477
  %1479 = vrot.lane.b32.xlu0 %v318, 56
  %v1480 = vpop.permute.xlu0 %1479
  %1481 = vrot.lane.b32.xlu0 %v323, 56
  %v1482 = vpop.permute.xlu0 %1481
  %1483 = vrot.lane.b32.xlu0 %v326, 56
  %v1484 = vpop.permute.xlu0 %1483
  %1485 = vrot.lane.b32.xlu0 %v331, 56
  %v1486 = vpop.permute.xlu0 %1485
  %1487 = vrot.lane.b32.xlu0 %v334, 56
  %v1488 = vpop.permute.xlu0 %1487
  %1489 = vrot.lane.b32.xlu0 %v339, 56
  %v1490 = vpop.permute.xlu0 %1489
  %1491 = vrot.lane.b32.xlu0 %v342, 56
  %v1492 = vpop.permute.xlu0 %1491
  %1493 = vrot.lane.b32.xlu0 %v347, 56
  %v1494 = vpop.permute.xlu0 %1493
  %1495 = vrot.lane.b32.xlu0 %v350, 56
  %v1496 = vpop.permute.xlu0 %1495
  %1497 = vrot.lane.b32.xlu0 %v355, 56
  %v1498 = vpop.permute.xlu0 %1497
  %1499 = vrot.lane.b32.xlu0 %v358, 56
  %v1500 = vpop.permute.xlu0 %1499
  %1501 = vrot.lane.b32.xlu0 %v363, 56
  %v1502 = vpop.permute.xlu0 %1501
  %1503 = vrot.lane.b32.xlu0 %v366, 56
  %v1504 = vpop.permute.xlu0 %1503
  %1505 = vrot.lane.b32.xlu0 %v371, 56
  %v1506 = vpop.permute.xlu0 %1505
  %1507 = vrot.lane.b32.xlu0 %v374, 56
  %v1508 = vpop.permute.xlu0 %1507
  %1509 = vrot.lane.b32.xlu0 %v379, 56
  %v1510 = vpop.permute.xlu0 %1509
  %1511 = vrot.lane.b32.xlu0 %v382, 56
  %v1512 = vpop.permute.xlu0 %1511
  %1513 = vrot.lane.b32.xlu0 %v387, 56
  %v1514 = vpop.permute.xlu0 %1513
  %1515 = vrot.lane.b32.xlu0 %v390, 56
  %v1516 = vpop.permute.xlu0 %1515
  %1517 = vrot.lane.b32.xlu0 %v395, 56
  %v1518 = vpop.permute.xlu0 %1517
  %1519 = vrot.lane.b32.xlu0 %v398, 56
  %v1520 = vpop.permute.xlu0 %1519
  %v1553 = vmax.f32 %v1425, %v1458
  %v1554 = vmax.f32 %v1426, %v1460
  %v1555 = vmax.f32 %v1427, %v1462
  %v1556 = vmax.f32 %v1428, %v1464
  %v1557 = vmax.f32 %v1429, %v1466
  %v1558 = vmax.f32 %v1430, %v1468
  %v1559 = vmax.f32 %v1431, %v1470
  %v1560 = vmax.f32 %v1432, %v1472
  %v1561 = vmax.f32 %v1433, %v1474
  %v1562 = vmax.f32 %v1434, %v1476
  %v1563 = vmax.f32 %v1435, %v1478
  %v1564 = vmax.f32 %v1436, %v1480
  %v1565 = vmax.f32 %v1437, %v1482
  %v1566 = vmax.f32 %v1438, %v1484
  %v1567 = vmax.f32 %v1439, %v1486
  %v1568 = vmax.f32 %v1440, %v1488
  %v1569 = vmax.f32 %v1441, %v1490
  %v1570 = vmax.f32 %v1442, %v1492
  %v1571 = vmax.f32 %v1443, %v1494
  %v1572 = vmax.f32 %v1444, %v1496
  %v1573 = vmax.f32 %v1445, %v1498
  %v1574 = vmax.f32 %v1446, %v1500
  %v1575 = vmax.f32 %v1447, %v1502
  %v1576 = vmax.f32 %v1448, %v1504
  %v1577 = vmax.f32 %v1449, %v1506
  %v1578 = vmax.f32 %v1450, %v1508
  %v1579 = vmax.f32 %v1451, %v1510
  %v1580 = vmax.f32 %v1452, %v1512
  %v1581 = vmax.f32 %v1453, %v1514
  %v1582 = vmax.f32 %v1454, %v1516
  %v1583 = vmax.f32 %v1455, %v1518
  %v1584 = vmax.f32 %v1456, %v1520
  %v1585 = vld [vmem:[%s2] sm:$0x1]
  %v1587 = vlaneseq
  %v1588 = vshrl.u32 %v1587, 7
  %v1589 = vsub.s32 0, %v1588
  %v1590 = vrot.slane %v1585, %v1589
  %v1592 = vadd.f32 %v1553, %v1590
  %v1593 = vadd.f32 %v1554, %v1590
  %v1594 = vadd.f32 %v1555, %v1590
  %v1595 = vadd.f32 %v1556, %v1590
  %v1596 = vadd.f32 %v1557, %v1590
  %v1597 = vadd.f32 %v1558, %v1590
  %v1598 = vadd.f32 %v1559, %v1590
  %v1599 = vadd.f32 %v1560, %v1590
  %v1600 = vadd.f32 %v1561, %v1590
  %v1601 = vadd.f32 %v1562, %v1590
  %v1602 = vadd.f32 %v1563, %v1590
  %v1603 = vadd.f32 %v1564, %v1590
  %v1604 = vadd.f32 %v1565, %v1590
  %v1605 = vadd.f32 %v1566, %v1590
  %v1606 = vadd.f32 %v1567, %v1590
  %v1607 = vadd.f32 %v1568, %v1590
  %v1608 = vadd.f32 %v1569, %v1590
  %v1609 = vadd.f32 %v1570, %v1590
  %v1610 = vadd.f32 %v1571, %v1590
  %v1611 = vadd.f32 %v1572, %v1590
  %v1612 = vadd.f32 %v1573, %v1590
  %v1613 = vadd.f32 %v1574, %v1590
  %v1614 = vadd.f32 %v1575, %v1590
  %v1615 = vadd.f32 %v1576, %v1590
  %v1616 = vadd.f32 %v1577, %v1590
  %v1617 = vadd.f32 %v1578, %v1590
  %v1618 = vadd.f32 %v1579, %v1590
  %v1619 = vadd.f32 %v1580, %v1590
  %v1620 = vadd.f32 %v1581, %v1590
  %v1621 = vadd.f32 %v1582, %v1590
  %v1622 = vadd.f32 %v1583, %v1590
  %v1623 = vadd.f32 %v1584, %v1590
  %vm1624 = vcmask 64512
  %1625 = vst.msk [vmem:[%s3] sm:$0xff] %vm1624, %v1592
  %1626 = vst.msk [vmem:[%s3 + $0x8] sm:$0xff] %vm1624, %v1593
  %1627 = vst.msk [vmem:[%s3 + $0x10] sm:$0xff] %vm1624, %v1594
  %1628 = vst.msk [vmem:[%s3 + $0x18] sm:$0xff] %vm1624, %v1595
  %1629 = vst.msk [vmem:[%s3 + $0x20] sm:$0xff] %vm1624, %v1596
  %1630 = vst.msk [vmem:[%s3 + $0x28] sm:$0xff] %vm1624, %v1597
  %1631 = vst.msk [vmem:[%s3 + $0x30] sm:$0xff] %vm1624, %v1598
  %1632 = vst.msk [vmem:[%s3 + $0x38] sm:$0xff] %vm1624, %v1599
  %1633 = vst.msk [vmem:[%s3 + $0x40] sm:$0xff] %vm1624, %v1600
  %1634 = vst.msk [vmem:[%s3 + $0x48] sm:$0xff] %vm1624, %v1601
  %1635 = vst.msk [vmem:[%s3 + $0x50] sm:$0xff] %vm1624, %v1602
  %1636 = vst.msk [vmem:[%s3 + $0x58] sm:$0xff] %vm1624, %v1603
  %1637 = vst.msk [vmem:[%s3 + $0x60] sm:$0xff] %vm1624, %v1604
  %1638 = vst.msk [vmem:[%s3 + $0x68] sm:$0xff] %vm1624, %v1605
  %1639 = vst.msk [vmem:[%s3 + $0x70] sm:$0xff] %vm1624, %v1606
  %1640 = vst.msk [vmem:[%s3 + $0x78] sm:$0xff] %vm1624, %v1607
  %1641 = vst.msk [vmem:[%s3 + $0x80] sm:$0xff] %vm1624, %v1608
  %1642 = vst.msk [vmem:[%s3 + $0x88] sm:$0xff] %vm1624, %v1609
  %1643 = vst.msk [vmem:[%s3 + $0x90] sm:$0xff] %vm1624, %v1610
  %1644 = vst.msk [vmem:[%s3 + $0x98] sm:$0xff] %vm1624, %v1611
  %1645 = vst.msk [vmem:[%s3 + $0xa0] sm:$0xff] %vm1624, %v1612
  %1646 = vst.msk [vmem:[%s3 + $0xa8] sm:$0xff] %vm1624, %v1613
  %1647 = vst.msk [vmem:[%s3 + $0xb0] sm:$0xff] %vm1624, %v1614
  %1648 = vst.msk [vmem:[%s3 + $0xb8] sm:$0xff] %vm1624, %v1615
  %1649 = vst.msk [vmem:[%s3 + $0xc0] sm:$0xff] %vm1624, %v1616
  %1650 = vst.msk [vmem:[%s3 + $0xc8] sm:$0xff] %vm1624, %v1617
  %1651 = vst.msk [vmem:[%s3 + $0xd0] sm:$0xff] %vm1624, %v1618
  %1652 = vst.msk [vmem:[%s3 + $0xd8] sm:$0xff] %vm1624, %v1619
  %1653 = vst.msk [vmem:[%s3 + $0xe0] sm:$0xff] %vm1624, %v1620
  %1654 = vst.msk [vmem:[%s3 + $0xe8] sm:$0xff] %vm1624, %v1621
  %1655 = vst.msk [vmem:[%s3 + $0xf0] sm:$0xff] %vm1624, %v1622
  %1656 = vst.msk [vmem:[%s3 + $0xf8] sm:$0xff] %vm1624, %v1623
  // Predicated region
  $region14: #{tpu_custom_call.1} parent=0 // pred_check
    _
  $region15: #{tpu_custom_call.1} parent=0 // pred_check_branch
    %1658 = sbr.rel (0) target = $region17
  $region16: #{tpu_custom_call.1} parent=0 // pred_region
    _
  $region17: #{tpu_custom_call.1} parent=0 // pred_fallthru
    _
  // Predicated region
  $region18: #{tpu_custom_call.1} parent=0 // pred_check
    _
  $region19: #{tpu_custom_call.1} parent=0 // pred_check_branch
    %1660 = sbr.rel (0) target = $region21
  $region20: #{tpu_custom_call.1} parent=0 // pred_region
    _
  $region21: #{tpu_custom_call.1} parent=0 // pred_fallthru
    _

</llo_original>
